<compile_context>
chip_gen: v7x
topology: tpu7x:2x2x1
jax: 0.10.0
libtpu: 0.0.40
codegen_flags: <defaults>
</compile_context>

<pallas_src>
import jax
import jax.numpy as jnp
from jax.experimental import pallas as pl
from jax.experimental.pallas import tpu as pltpu

HEIGHT = 512               # NAIVE_SV._height == in_features of fc
_LANES = 128               # TPU lane width; output columns padded to this
_MAX_TM = 1024             # max rows per grid step
_XLA_FALLBACK_ROWS = 512   # below this many rows, plain XLA is faster than a launch


def _round_up(x, m):
    return (x + m - 1) // m * m


# ----------------------------------------------------------------------------
# Pallas kernel: one M-tile of  out = x @ w + b  (f32 accumulate on the MXU)
# ----------------------------------------------------------------------------
def _linear_kernel(x_ref, w_ref, b_ref, o_ref):
    # x_ref: (TM, K), w_ref: (K, N_pad), b_ref: (1, N_pad), o_ref: (TM, N_pad)
    acc = jnp.dot(x_ref[...], w_ref[...], preferred_element_type=jnp.float32)
    o_ref[...] = (acc + b_ref[...]).astype(o_ref.dtype)


# ----------------------------------------------------------------------------
# Wrapper: M-tiled, lane-dense linear.  No padding of x; columns sliced at the end.
# ----------------------------------------------------------------------------
def pallas_linear(x2d, w_kn_pad, b_row_pad, n_out):
    """(M, 512) @ (512, N_pad) + (1, N_pad) -> (M, n_out)."""
    M, K = x2d.shape
    Kw, N_pad = w_kn_pad.shape
    assert K == Kw == HEIGHT and N_pad % _LANES == 0

    if M <= _XLA_FALLBACK_ROWS:
        # Tiny-M fast path: launch/slice overhead would dominate the kernel.
        return x2d @ w_kn_pad[:, :n_out] + b_row_pad[0, :n_out]

    # TM: multiple of 8 sublanes, capped at _MAX_TM, and chosen so the grid has at
    # least 2 steps (so the parallel M axis can shard across both v7x TensorCores).
    M8 = _round_up(M, 8)
    TM = min(_MAX_TM, max(8, _round_up(pl.cdiv(M8, 2), 8)))
    grid_m = pl.cdiv(M, TM)

    out = pl.pallas_call(
        _linear_kernel,
        out_shape=jax.ShapeDtypeStruct((M, N_pad), jnp.float32),
        grid=(grid_m,),
        in_specs=[
            pl.BlockSpec((TM, K), lambda i: (i, 0)),       # x: tiled over M (no pad)
            pl.BlockSpec((K, N_pad), lambda i: (0, 0)),    # w: resident across steps
            pl.BlockSpec((1, N_pad), lambda i: (0, 0)),    # bias: tiny, resident
        ],
        out_specs=pl.BlockSpec((TM, N_pad), lambda i: (i, 0)),
        compiler_params=pltpu.CompilerParams(
            dimension_semantics=("parallel",),
        ),
    )(x2d, w_kn_pad, b_row_pad)
    return out[:, :n_out]


# ----------------------------------------------------------------------------
# Param prep (once) + forward
# ----------------------------------------------------------------------------
def prepare_fc(fc_w, fc_b):
    """One-time conversion of PyTorch-layout Linear params to the kernel layout.

    fc_w: (speakers_num, 512) PyTorch weight; fc_b: (speakers_num,).
    Returns weight as (512, N_pad) and bias as (1, N_pad), zero-padded to 128 lanes.
    """
    n = fc_w.shape[0]
    n_pad = _round_up(max(n, 1), _LANES)
    w_kn_pad = jnp.pad(fc_w.T.astype(jnp.float32), ((0, 0), (0, n_pad - n)))
    b_row_pad = jnp.pad(fc_b.astype(jnp.float32), (0, n_pad - n)).reshape(1, n_pad)
    return {"w_kn_pad": w_kn_pad, "b_row_pad": b_row_pad, "n_out": n}


def naive_sv_forward(prepared, x):
    """NAIVE_SV.forward: x -> fc(x), fc = nn.Linear(512, speakers_num).

    Accepts any leading dims; the last dim must be 512 (nn.Linear semantics).
    """
    # TODO(synk): the class docstring mentions an AvgPool over the time axis, but
    # NAIVE_SV.forward() only applies self.fc; we implement forward() exactly.
    lead = x.shape[:-1]
    x2d = x.reshape(-1, x.shape[-1])
    out = pallas_linear(x2d, prepared["w_kn_pad"], prepared["b_row_pad"],
                        prepared["n_out"])
    return out.reshape(*lead, prepared["n_out"])


if __name__ == "__main__":
    key = jax.random.PRNGKey(0)
    k_w, k_b, k_small, k_big = jax.random.split(key, 4)

    speakers_num = 10
    bound = 1.0 / (HEIGHT ** 0.5)
    fc_w = jax.random.uniform(k_w, (speakers_num, HEIGHT), jnp.float32, -bound, bound)
    fc_b = jax.random.uniform(k_b, (speakers_num,), jnp.float32, -bound, bound)
    prepared = prepare_fc(fc_w, fc_b)   # one-time transpose/pad (hoisted out of forward)

    # (batch, time, 512) utterance batch — enough rows to take the Pallas path.
    x_big = jax.random.normal(k_big, (2, 298, HEIGHT), dtype=jnp.float32)
    logits_big = jax.block_until_ready(naive_sv_forward(prepared, x_big))
    assert logits_big.shape == (2, 298, speakers_num)
    ref_big = x_big @ fc_w.T + fc_b
    assert jnp.allclose(logits_big, ref_big, atol=1e-4, rtol=1e-4)

    # Tiny batch exercises the small-M XLA fast path.
    x_small = jax.random.normal(k_small, (2, HEIGHT), dtype=jnp.float32)
    logits_small = jax.block_until_ready(naive_sv_forward(prepared, x_small))
    assert logits_small.shape == (2, speakers_num)
    ref_small = x_small @ fc_w.T + fc_b
    assert jnp.allclose(logits_small, ref_small, atol=1e-4, rtol=1e-4)

    print("KERNEL_OK")
</pallas_src>

<mosaic_0001>
module attributes {stable_mosaic.version = 11 : i64} {
  func.func @_linear_kernel(%arg0: i32, %arg1: memref<304x512xf32, #tpu.memory_space<vmem>>, %arg2: memref<512x128xf32, #tpu.memory_space<vmem>>, %arg3: memref<1x128xf32, #tpu.memory_space<vmem>>, %arg4: memref<304x128xf32, #tpu.memory_space<vmem>>) attributes {dimension_semantics = [#tpu.dimension_semantics<parallel>], iteration_bounds = array<i64: 2>, scalar_prefetch = 0 : i64, scratch_operands = 0 : i64, tpu.core_type = #tpu.core_type<tc>, window_params = [{transform_indices = @transform_0, window_bounds = array<i64: 304, 512>}, {pipeline_mode = #tpu.pipeline_mode<synchronous>, transform_indices = @transform_1, window_bounds = array<i64: 512, 128>}, {pipeline_mode = #tpu.pipeline_mode<synchronous>, transform_indices = @transform_2, window_bounds = array<i64: 1, 128>}, {transform_indices = @transform_3, window_bounds = array<i64: 304, 128>}]} {
    %c0 = arith.constant 0 : index
    %c0_0 = arith.constant 0 : index
    %0 = vector.load %arg1[%c0, %c0_0] : memref<304x512xf32, #tpu.memory_space<vmem>>, vector<304x512xf32>
    %c0_1 = arith.constant 0 : index
    %c0_2 = arith.constant 0 : index
    %1 = vector.load %arg2[%c0_1, %c0_2] : memref<512x128xf32, #tpu.memory_space<vmem>>, vector<512x128xf32>
    %cst = arith.constant dense<0.000000e+00> : vector<304x128xf32>
    %2 = tpu.matmul %0, %1, %cst {dimension_numbers = #tpu.dot_dimension_numbers<[1], [0], [0], [1], [0, 0, 1, 1], [], []>} : vector<304x512xf32>, vector<512x128xf32>, vector<304x128xf32> -> vector<304x128xf32>
    %c0_3 = arith.constant 0 : index
    %c0_4 = arith.constant 0 : index
    %3 = vector.load %arg3[%c0_3, %c0_4] : memref<1x128xf32, #tpu.memory_space<vmem>>, vector<1x128xf32>
    %4 = vector.broadcast %3 : vector<1x128xf32> to vector<304x128xf32>
    %5 = arith.addf %2, %4 : vector<304x128xf32>
    %c0_5 = arith.constant 0 : index
    %c0_6 = arith.constant 0 : index
    %6 = vector.load %arg4[%c0_5, %c0_6] : memref<304x128xf32, #tpu.memory_space<vmem>>, vector<304x128xf32>
    tpu.vector_store %arg4[%c0_5, %c0_6], %5 {strides = array<i32>} : memref<304x128xf32, #tpu.memory_space<vmem>>, vector<304x128xf32>,
    return
  }
  func.func @transform_0(%arg0: i32) -> (i32, i32) {
    %c0_i32 = arith.constant 0 : i32
    %c0_i32_0 = arith.constant 0 : i32
    return %arg0, %c0_i32 : i32, i32
  }
  func.func @transform_1(%arg0: i32) -> (i32, i32) {
    %c0_i32 = arith.constant 0 : i32
    %c0_i32_0 = arith.constant 0 : i32
    %c0_i32_1 = arith.constant 0 : i32
    return %c0_i32, %c0_i32_0 : i32, i32
  }
  func.func @transform_2(%arg0: i32) -> (i32, i32) {
    %c0_i32 = arith.constant 0 : i32
    %c0_i32_0 = arith.constant 0 : i32
    %c0_i32_1 = arith.constant 0 : i32
    return %c0_i32, %c0_i32_0 : i32, i32
  }
  func.func @transform_3(%arg0: i32) -> (i32, i32) {
    %c0_i32 = arith.constant 0 : i32
    %c0_i32_0 = arith.constant 0 : i32
    return %arg0, %c0_i32 : i32, i32
  }
}

</mosaic_0001>

<llo_original>
// kernel: tpu_custom_call.1
$region0: #{tpu_custom_call.1}
  #allocation0 [shape = 'u32[]', space=smem, size = 0x4, offset = 0x4, fixed_abs, tag = 'smem constant byte address 0x4 - core index']
  #allocation1 [shape = 'u32[144,128]{1,0:T(1,128)}', space=vmem, size = 0x12000, scoped, tag = 'internal scratch']
  %s0 = inlined_call_operand.hbm [shape: f32[596,512], index: 0, kind: input, shape index: {}]
  %s1 = inlined_call_operand.hbm [shape: f32[512,128], index: 1, kind: input, shape index: {}]
  %s2 = inlined_call_operand.hbm [shape: f32[1,128], index: 2, kind: input, shape index: {}]
  %s3 = inlined_call_operand.hbm [shape: f32[596,128], index: 3, kind: output, shape index: {}]
  %s4 = sld [smem:[#allocation0]]
  $region57: #{tpu_custom_call.1} parent=0
    _
  %s6 = ssub.s32 1, %s4
  %s7 = scalar_select 0, %s6, %s4
  $region1: #{tpu_custom_call.1} parent=0
    #allocation2 [shape = 'u8[1245184]{0}', space=vmem, size = 0x130000, scoped, tag = 'input window, operand 0']
    #allocation3 [shape = 's32[2]{0}', space=sflag, size = 0x8, scoped, tag = 'scoped memory for tpu_custom_call.1']
    #allocation4 [shape = 's32[2]{0}', space=sflag, size = 0x8, scoped, tag = 'scoped memory for tpu_custom_call.1']
    #allocation5 [shape = 'u8[262144]{0}', space=vmem, size = 0x40000, scoped, tag = 'input window, operand 1, single buffered']
    #allocation6 [shape = 's32[1]{0}', space=sflag, size = 0x4, scoped, tag = 'scoped memory for tpu_custom_call.1']
    #allocation7 [shape = 'u8[512]{0}', space=vmem, size = 0x400, scoped, tag = 'input window, operand 2, single buffered']
    #allocation8 [shape = 'u8[311296]{0}', space=vmem, size = 0x4c000, scoped, tag = 'output window, operand 0']
    %8 = vsyncpa [#allocation3], 0
    %s9 = scalar_lea.sflag [#allocation3], 1
    %10 = vsyncpa %s9, 0
    %11 = vsyncpa [#allocation6], 0
    %12 = vsyncpa [#allocation4], 0
    %s13 = scalar_lea.sflag [#allocation4], 1
    %14 = vsyncpa %s13, 0
    loop: start=0, step=1, limit=4
    $region2: #{tpu_custom_call.1} parent=1 // loop_pre_header
      _
    $region3: #{tpu_custom_call.1} parent=1 // loop_header
      %s16 = sphi 0, %s20
      %p17 = scmp.ge.s32.totalorder %s16, 4
      %s26 = sphi 0, %s28
      %s29 = sphi 0, %s26
      %s30 = sphi 0, %s29
      %s46 = sphi 0, %s30
      %s50 = sphi 0, %s50
      %s52 = sphi 0, %s50
      %s53 = sphi 0, %s52
      %s67 = sphi 0, %s53
      %s71 = sphi 0, %s71
      %s73 = sphi 0, %s71
      %s74 = sphi 0, %s73
      %s88 = sphi 0, %s74
      %s94 = sphi 0, %s96
      %s97 = sphi 0, %s94
      %s98 = sphi 0, %s97
      %s114 = sphi 0, %s98
    $region4: #{tpu_custom_call.1} parent=1 // loop_header_branch
      %19 = sbr.rel (%p17) target = $region8
    $region5: #{tpu_custom_call.1} parent=1 // loop_body
      %s21 = ssub.s32 %s16, 1
      %s22 = ssub.s32 %s16, 2
      %s23 = sadd.s32 %s16, 1
      %s24 = ssub.s32 %s16, %s23
      %p25 = scmp.eq.s32.totalorder %s24, 0
      %s27 = sadd.s32 %s26, 1
      %s28 = scalar_select %p25, %s26, %s27
      %p31 = pneg %p25
      %p32 = scmp.eq.s32.totalorder %s16, 1
      %p33 = por %p31, %p32
      %p34 = scmp.ne.s32.totalorder %s26, %s29
      %p35 = scmp.eq.s32.totalorder %s16, 0
      %p36 = por %p34, %p35
      %p37 = scmp.ne.s32.totalorder %s26, %s29
      %p38 = scmp.eq.s32.totalorder %s21, 1
      %p39 = por %p37, %p38
      %p40 = scmp.ne.s32.totalorder %s29, %s30
      %p41 = scmp.eq.s32.totalorder %s21, 0
      %p42 = por %p40, %p41
      %p43 = scmp.ne.s32.totalorder %s29, %s30
      %p44 = scmp.eq.s32.totalorder %s22, 1
      %p45 = por %p43, %p44
      %p47 = scmp.ne.s32.totalorder %s30, %s46
      %p48 = scmp.eq.s32.totalorder %s22, 0
      %p49 = por %p47, %p48
      %s51 = sadd.s32 %s50, 1
      %p54 = scmp.eq.s32.totalorder %s16, 1
      %p55 = scmp.ne.s32.totalorder %s50, %s52
      %p56 = scmp.eq.s32.totalorder %s16, 0
      %p57 = por %p55, %p56
      %p58 = scmp.ne.s32.totalorder %s50, %s52
      %p59 = scmp.eq.s32.totalorder %s21, 1
      %p60 = por %p58, %p59
      %p61 = scmp.ne.s32.totalorder %s52, %s53
      %p62 = scmp.eq.s32.totalorder %s21, 0
      %p63 = por %p61, %p62
      %p64 = scmp.ne.s32.totalorder %s52, %s53
      %p65 = scmp.eq.s32.totalorder %s22, 1
      %p66 = por %p64, %p65
      %p68 = scmp.ne.s32.totalorder %s53, %s67
      %p69 = scmp.eq.s32.totalorder %s22, 0
      %p70 = por %p68, %p69
      %s72 = sadd.s32 %s71, 1
      %p75 = scmp.eq.s32.totalorder %s16, 1
      %p76 = scmp.ne.s32.totalorder %s71, %s73
      %p77 = scmp.eq.s32.totalorder %s16, 0
      %p78 = por %p76, %p77
      %p79 = scmp.ne.s32.totalorder %s71, %s73
      %p80 = scmp.eq.s32.totalorder %s21, 1
      %p81 = por %p79, %p80
      %p82 = scmp.ne.s32.totalorder %s73, %s74
      %p83 = scmp.eq.s32.totalorder %s21, 0
      %p84 = por %p82, %p83
      %p85 = scmp.ne.s32.totalorder %s73, %s74
      %p86 = scmp.eq.s32.totalorder %s22, 1
      %p87 = por %p85, %p86
      %p89 = scmp.ne.s32.totalorder %s74, %s88
      %p90 = scmp.eq.s32.totalorder %s22, 0
      %p91 = por %p89, %p90
      %s92 = ssub.s32 %s16, %s23
      %p93 = scmp.eq.s32.totalorder %s92, 0
      %s95 = sadd.s32 %s94, 1
      %s96 = scalar_select %p93, %s94, %s95
      %p99 = pneg %p93
      %p100 = scmp.eq.s32.totalorder %s16, 1
      %p101 = por %p99, %p100
      %p102 = scmp.ne.s32.totalorder %s94, %s97
      %p103 = scmp.eq.s32.totalorder %s16, 0
      %p104 = por %p102, %p103
      %p105 = scmp.ne.s32.totalorder %s94, %s97
      %p106 = scmp.eq.s32.totalorder %s21, 1
      %p107 = por %p105, %p106
      %p108 = scmp.ne.s32.totalorder %s97, %s98
      %p109 = scmp.eq.s32.totalorder %s21, 0
      %p110 = por %p108, %p109
      %p111 = scmp.ne.s32.totalorder %s97, %s98
      %p112 = scmp.eq.s32.totalorder %s22, 1
      %p113 = por %p111, %p112
      %p115 = scmp.ne.s32.totalorder %s98, %s114
      %p116 = scmp.eq.s32.totalorder %s22, 0
      %p117 = por %p115, %p116
      %p118 = scmp.le.s32.totalorder 1, %s16
      %p119 = scmp.lt.s32.totalorder %s16, 3
      %p120 = pnand %p118, %p119
      %p121 = pneg %p120
      // Predicated region
      $region9: #{tpu_custom_call.1} parent=5 // pred_check
        _
      $region10: #{tpu_custom_call.1} parent=5 // pred_check_branch
        %123 = sbr.rel (%p120) target = $region12
      $region11: #{tpu_custom_call.1} parent=5 // pred_region
        %s124 = ssub.s32 %s16, 1
        // Predicated region
        $region13: #{tpu_custom_call.1} parent=11 // pred_check
          %p125 = pneg %p63
        $region14: #{tpu_custom_call.1} parent=11 // pred_check_branch
          %127 = sbr.rel (%p125) target = $region16
        $region15: #{tpu_custom_call.1} parent=11 // pred_region
          %s129 = ssub.s32 8192, 8192
          %130 = vsyncadd [#allocation6], %s129
          %s131 = sshll.u32 [#allocation5], 4
          %s132 = int_to_ptr.vmem [resolvable:$true] %s131
          %137 = dma.hbm_to_vmem [thread:$0]  %s1, 8192, %s132, [#allocation6], 128, 128, 8
        $region16: #{tpu_custom_call.1} parent=11 // pred_fallthru
          _
        // Predicated region
        $region17: #{tpu_custom_call.1} parent=11 // pred_check
          %p138 = pneg %p84
        $region18: #{tpu_custom_call.1} parent=11 // pred_check_branch
          %140 = sbr.rel (%p138) target = $region20
        $region19: #{tpu_custom_call.1} parent=11 // pred_region
          %s142 = ssub.s32 16, 16
          %143 = vsyncadd [#allocation6], %s142
          %s145 = sshll.u32 [#allocation7], 4
          %s146 = int_to_ptr.vmem [resolvable:$true] %s145
          %148 = dma.hbm_to_vmem [thread:$0]  %s2, 16, %s146, [#allocation6]
        $region20: #{tpu_custom_call.1} parent=11 // pred_fallthru
          _
      $region12: #{tpu_custom_call.1} parent=5 // pred_fallthru
        _
      %p149 = scmp.lt.s32.totalorder %s16, 2
      // Predicated region
      $region21: #{tpu_custom_call.1} parent=5 // pred_check
        %p150 = pneg %p149
      $region22: #{tpu_custom_call.1} parent=5 // pred_check_branch
        %152 = sbr.rel (%p150) target = $region24
      $region23: #{tpu_custom_call.1} parent=5 // pred_region
        // Predicated region
        $region25: #{tpu_custom_call.1} parent=23 // pred_check
          %p153 = pneg %p36
        $region26: #{tpu_custom_call.1} parent=23 // pred_check_branch
          %155 = sbr.rel (%p153) target = $region28
        $region27: #{tpu_custom_call.1} parent=23 // pred_region
          %s156 = sand.u32 %s26, 1
          %s157 = scalar_lea.sflag [#allocation3], %s156
          %s158 = sand.u32 %s26, 1
          %s159 = smul.addr %s158, 1216
          %s160 = scalar_lea.vmem [#allocation2], %s159
          %s161 = smul.u32 38, %s16
          %s162 = ssub.s32 75, %s161
          %p163 = scmp.lt.s32.totalorder %s162, 38
          %s164 = scalar_select %p163, %s162, 38
          %s165 = smul.u32 128, %s164
          %s166 = smul.u32 %s165, 4
          %s168 = ssub.s32 19456, %s166
          %169 = vsyncadd %s157, %s168
          %p170 = scmp.ne.s32.totalorder 0, %s166
          %s171 = smul.addr %s161, 4
          %s172 = smul.addr %s171, 128
          %s173 = scalar_lea.hbm %s0, %s172
          %s174 = smul.u32 32, %s164
          %s175 = sshll.u32 %s160, 4
          %s176 = int_to_ptr.vmem [resolvable:$true] %s175
          %s177 = sshll.u32 %s174, 4
          %181 = dma.hbm_to_vmem [thread:$0]  (%p170), %s173, %s177, %s176, %s157, 512, 512, 32
        $region28: #{tpu_custom_call.1} parent=23 // pred_fallthru
          _
      $region24: #{tpu_custom_call.1} parent=5 // pred_fallthru
        _
      %p182 = scmp.le.s32.totalorder 1, %s16
      %p183 = scmp.lt.s32.totalorder %s16, 3
      %p184 = pnand %p182, %p183
      %p185 = pneg %p184
      // Predicated region
      $region29: #{tpu_custom_call.1} parent=5 // pred_check
        _
      $region30: #{tpu_custom_call.1} parent=5 // pred_check_branch
        %187 = sbr.rel (%p184) target = $region32
      $region31: #{tpu_custom_call.1} parent=5 // pred_region
        %s188 = ssub.s32 %s16, 1
        %s189 = sand.u32 %s29, 1
        %s190 = scalar_lea.sflag [#allocation3], %s189
        %s191 = sand.u32 %s29, 1
        %s192 = smul.addr %s191, 1216
        %s193 = scalar_lea.vmem [#allocation2], %s192
        // Predicated region
        $region33: #{tpu_custom_call.1} parent=31 // pred_check
          %p194 = pneg %p42
        $region34: #{tpu_custom_call.1} parent=31 // pred_check_branch
          %196 = sbr.rel (%p194) target = $region36
        $region35: #{tpu_custom_call.1} parent=31 // pred_region
          %197 = dma.done %s190, 19456
        $region36: #{tpu_custom_call.1} parent=31 // pred_fallthru
          _
        // Predicated region
        $region37: #{tpu_custom_call.1} parent=31 // pred_check
          %p198 = pneg %p63
        $region38: #{tpu_custom_call.1} parent=31 // pred_check_branch
          %200 = sbr.rel (%p198) target = $region40
        $region39: #{tpu_custom_call.1} parent=31 // pred_region
          %201 = dma.done [#allocation6], 8192
        $region40: #{tpu_custom_call.1} parent=31 // pred_fallthru
          _
        // Predicated region
        $region41: #{tpu_custom_call.1} parent=31 // pred_check
          %p202 = pneg %p84
        $region42: #{tpu_custom_call.1} parent=31 // pred_check_branch
          %204 = sbr.rel (%p202) target = $region44
        $region43: #{tpu_custom_call.1} parent=31 // pred_region
          %205 = dma.done [#allocation6], 16
        $region44: #{tpu_custom_call.1} parent=31 // pred_fallthru
          _
        %s206 = sand.u32 %s29, 1
        %s207 = scalar_lea.sflag [#allocation3], %s206
        %s208 = sand.u32 %s29, 1
        %s209 = smul.addr %s208, 1216
        %s210 = scalar_lea.vmem [#allocation2], %s209
        %p211 = pneg %p42
        %p212 = pneg %p39
        %p213 = pneg %p63
        %p214 = pneg %p60
        %p215 = pneg %p84
        %p216 = pneg %p81
        %p217 = pneg %p110
        %p218 = pneg %p107
        %s219 = sand.u32 %s97, 1
        %s220 = scalar_lea.sflag [#allocation4], %s219
        %s221 = sand.u32 %s97, 1
        %s222 = smul.addr %s221, 304
        %s223 = scalar_lea.vmem [#allocation8], %s222
        %s224 = smul.u32 38, %s21
        %s225 = ssub.s32 75, %s224
        %p226 = scmp.lt.s32.totalorder %s225, 38
        %s227 = scalar_select %p226, %s225, 38
        %s228 = smul.u32 128, %s227
        %s229 = smul.u32 %s228, 4
        %s230 = smul.u32 38, %s21
        %s231 = ssub.s32 75, %s230
        %p232 = scmp.lt.s32.totalorder %s231, 38
        %s233 = scalar_select %p232, %s231, 38
        %s234 = smul.u32 128, %s233
        %v235 = vld [vmem:[%s193] sm:$0xff]
        %v236 = vld [vmem:[%s193 + $0x8] sm:$0xff]
        %v237 = vld [vmem:[%s193 + $0x10] sm:$0xff]
        %v238 = vld [vmem:[%s193 + $0x18] sm:$0xff]
        %v239 = vld [vmem:[%s193 + $0x20] sm:$0xff]
        %v240 = vld [vmem:[%s193 + $0x28] sm:$0xff]
        %v241 = vld [vmem:[%s193 + $0x30] sm:$0xff]
        %v242 = vld [vmem:[%s193 + $0x38] sm:$0xff]
        %v243 = vld [vmem:[%s193 + $0x40] sm:$0xff]
        %v244 = vld [vmem:[%s193 + $0x48] sm:$0xff]
        %v245 = vld [vmem:[%s193 + $0x50] sm:$0xff]
        %v246 = vld [vmem:[%s193 + $0x58] sm:$0xff]
        %v247 = vld [vmem:[%s193 + $0x60] sm:$0xff]
        %v248 = vld [vmem:[%s193 + $0x68] sm:$0xff]
        %v249 = vld [vmem:[%s193 + $0x70] sm:$0xff]
        %v250 = vld [vmem:[%s193 + $0x78] sm:$0xff]
        %v251 = vld [vmem:[%s193 + $0x80] sm:$0xff]
        %v252 = vld [vmem:[%s193 + $0x88] sm:$0xff]
        %v253 = vld [vmem:[%s193 + $0x90] sm:$0xff]
        %v254 = vld [vmem:[%s193 + $0x98] sm:$0xff]
        %v255 = vld [vmem:[%s193 + $0xa0] sm:$0xff]
        %v256 = vld [vmem:[%s193 + $0xa8] sm:$0xff]
        %v257 = vld [vmem:[%s193 + $0xb0] sm:$0xff]
        %v258 = vld [vmem:[%s193 + $0xb8] sm:$0xff]
        %v259 = vld [vmem:[%s193 + $0xc0] sm:$0xff]
        %v260 = vld [vmem:[%s193 + $0xc8] sm:$0xff]
        %v261 = vld [vmem:[%s193 + $0xd0] sm:$0xff]
        %v262 = vld [vmem:[%s193 + $0xd8] sm:$0xff]
        %v263 = vld [vmem:[%s193 + $0xe0] sm:$0xff]
        %v264 = vld [vmem:[%s193 + $0xe8] sm:$0xff]
        %v265 = vld [vmem:[%s193 + $0xf0] sm:$0xff]
        %v266 = vld [vmem:[%s193 + $0xf8] sm:$0xff]
        %v267 = vld [vmem:[%s193 + $0x100] sm:$0xff]
        %v268 = vld [vmem:[%s193 + $0x108] sm:$0xff]
        %v269 = vld [vmem:[%s193 + $0x110] sm:$0xff]
        %v270 = vld [vmem:[%s193 + $0x118] sm:$0xff]
        %v271 = vld [vmem:[%s193 + $0x120] sm:$0xff]
        %v272 = vld [vmem:[%s193 + $0x128] sm:$0xff]
        %v273 = vld [vmem:[%s193 + $0x130] sm:$0xff]
        %v274 = vld [vmem:[%s193 + $0x138] sm:$0xff]
        %v275 = vld [vmem:[%s193 + $0x140] sm:$0xff]
        %v276 = vld [vmem:[%s193 + $0x148] sm:$0xff]
        %v277 = vld [vmem:[%s193 + $0x150] sm:$0xff]
        %v278 = vld [vmem:[%s193 + $0x158] sm:$0xff]
        %v279 = vld [vmem:[%s193 + $0x160] sm:$0xff]
        %v280 = vld [vmem:[%s193 + $0x168] sm:$0xff]
        %v281 = vld [vmem:[%s193 + $0x170] sm:$0xff]
        %v282 = vld [vmem:[%s193 + $0x178] sm:$0xff]
        %v283 = vld [vmem:[%s193 + $0x180] sm:$0xff]
        %v284 = vld [vmem:[%s193 + $0x188] sm:$0xff]
        %v285 = vld [vmem:[%s193 + $0x190] sm:$0xff]
        %v286 = vld [vmem:[%s193 + $0x198] sm:$0xff]
        %v287 = vld [vmem:[%s193 + $0x1a0] sm:$0xff]
        %v288 = vld [vmem:[%s193 + $0x1a8] sm:$0xff]
        %v289 = vld [vmem:[%s193 + $0x1b0] sm:$0xff]
        %v290 = vld [vmem:[%s193 + $0x1b8] sm:$0xff]
        %v291 = vld [vmem:[%s193 + $0x1c0] sm:$0xff]
        %v292 = vld [vmem:[%s193 + $0x1c8] sm:$0xff]
        %v293 = vld [vmem:[%s193 + $0x1d0] sm:$0xff]
        %v294 = vld [vmem:[%s193 + $0x1d8] sm:$0xff]
        %v295 = vld [vmem:[%s193 + $0x1e0] sm:$0xff]
        %v296 = vld [vmem:[%s193 + $0x1e8] sm:$0xff]
        %v297 = vld [vmem:[%s193 + $0x1f0] sm:$0xff]
        %v298 = vld [vmem:[%s193 + $0x1f8] sm:$0xff]
        %v299 = vld [vmem:[%s193 + $0x200] sm:$0xff]
        %v300 = vld [vmem:[%s193 + $0x208] sm:$0xff]
        %v301 = vld [vmem:[%s193 + $0x210] sm:$0xff]
        %v302 = vld [vmem:[%s193 + $0x218] sm:$0xff]
        %v303 = vld [vmem:[%s193 + $0x220] sm:$0xff]
        %v304 = vld [vmem:[%s193 + $0x228] sm:$0xff]
        %v305 = vld [vmem:[%s193 + $0x230] sm:$0xff]
        %v306 = vld [vmem:[%s193 + $0x238] sm:$0xff]
        %v307 = vld [vmem:[%s193 + $0x240] sm:$0xff]
        %v308 = vld [vmem:[%s193 + $0x248] sm:$0xff]
        %v309 = vld [vmem:[%s193 + $0x250] sm:$0xff]
        %v310 = vld [vmem:[%s193 + $0x258] sm:$0xff]
        %v311 = vld [vmem:[%s193 + $0x260] sm:$0xff]
        %v312 = vld [vmem:[%s193 + $0x268] sm:$0xff]
        %v313 = vld [vmem:[%s193 + $0x270] sm:$0xff]
        %v314 = vld [vmem:[%s193 + $0x278] sm:$0xff]
        %v315 = vld [vmem:[%s193 + $0x280] sm:$0xff]
        %v316 = vld [vmem:[%s193 + $0x288] sm:$0xff]
        %v317 = vld [vmem:[%s193 + $0x290] sm:$0xff]
        %v318 = vld [vmem:[%s193 + $0x298] sm:$0xff]
        %v319 = vld [vmem:[%s193 + $0x2a0] sm:$0xff]
        %v320 = vld [vmem:[%s193 + $0x2a8] sm:$0xff]
        %v321 = vld [vmem:[%s193 + $0x2b0] sm:$0xff]
        %v322 = vld [vmem:[%s193 + $0x2b8] sm:$0xff]
        %v323 = vld [vmem:[%s193 + $0x2c0] sm:$0xff]
        %v324 = vld [vmem:[%s193 + $0x2c8] sm:$0xff]
        %v325 = vld [vmem:[%s193 + $0x2d0] sm:$0xff]
        %v326 = vld [vmem:[%s193 + $0x2d8] sm:$0xff]
        %v327 = vld [vmem:[%s193 + $0x2e0] sm:$0xff]
        %v328 = vld [vmem:[%s193 + $0x2e8] sm:$0xff]
        %v329 = vld [vmem:[%s193 + $0x2f0] sm:$0xff]
        %v330 = vld [vmem:[%s193 + $0x2f8] sm:$0xff]
        %v331 = vld [vmem:[%s193 + $0x300] sm:$0xff]
        %v332 = vld [vmem:[%s193 + $0x308] sm:$0xff]
        %v333 = vld [vmem:[%s193 + $0x310] sm:$0xff]
        %v334 = vld [vmem:[%s193 + $0x318] sm:$0xff]
        %v335 = vld [vmem:[%s193 + $0x320] sm:$0xff]
        %v336 = vld [vmem:[%s193 + $0x328] sm:$0xff]
        %v337 = vld [vmem:[%s193 + $0x330] sm:$0xff]
        %v338 = vld [vmem:[%s193 + $0x338] sm:$0xff]
        %v339 = vld [vmem:[%s193 + $0x340] sm:$0xff]
        %v340 = vld [vmem:[%s193 + $0x348] sm:$0xff]
        %v341 = vld [vmem:[%s193 + $0x350] sm:$0xff]
        %v342 = vld [vmem:[%s193 + $0x358] sm:$0xff]
        %v343 = vld [vmem:[%s193 + $0x360] sm:$0xff]
        %v344 = vld [vmem:[%s193 + $0x368] sm:$0xff]
        %v345 = vld [vmem:[%s193 + $0x370] sm:$0xff]
        %v346 = vld [vmem:[%s193 + $0x378] sm:$0xff]
        %v347 = vld [vmem:[%s193 + $0x380] sm:$0xff]
        %v348 = vld [vmem:[%s193 + $0x388] sm:$0xff]
        %v349 = vld [vmem:[%s193 + $0x390] sm:$0xff]
        %v350 = vld [vmem:[%s193 + $0x398] sm:$0xff]
        %v351 = vld [vmem:[%s193 + $0x3a0] sm:$0xff]
        %v352 = vld [vmem:[%s193 + $0x3a8] sm:$0xff]
        %v353 = vld [vmem:[%s193 + $0x3b0] sm:$0xff]
        %v354 = vld [vmem:[%s193 + $0x3b8] sm:$0xff]
        %v355 = vld [vmem:[%s193 + $0x3c0] sm:$0xff]
        %v356 = vld [vmem:[%s193 + $0x3c8] sm:$0xff]
        %v357 = vld [vmem:[%s193 + $0x3d0] sm:$0xff]
        %v358 = vld [vmem:[%s193 + $0x3d8] sm:$0xff]
        %v359 = vld [vmem:[%s193 + $0x3e0] sm:$0xff]
        %v360 = vld [vmem:[%s193 + $0x3e8] sm:$0xff]
        %v361 = vld [vmem:[%s193 + $0x3f0] sm:$0xff]
        %v362 = vld [vmem:[%s193 + $0x3f8] sm:$0xff]
        %v363 = vld [vmem:[%s193 + $0x400] sm:$0xff]
        %v364 = vld [vmem:[%s193 + $0x408] sm:$0xff]
        %v365 = vld [vmem:[%s193 + $0x410] sm:$0xff]
        %v366 = vld [vmem:[%s193 + $0x418] sm:$0xff]
        %v367 = vld [vmem:[%s193 + $0x420] sm:$0xff]
        %v368 = vld [vmem:[%s193 + $0x428] sm:$0xff]
        %v369 = vld [vmem:[%s193 + $0x430] sm:$0xff]
        %v370 = vld [vmem:[%s193 + $0x438] sm:$0xff]
        %v371 = vld [vmem:[%s193 + $0x440] sm:$0xff]
        %v372 = vld [vmem:[%s193 + $0x448] sm:$0xff]
        %v373 = vld [vmem:[%s193 + $0x450] sm:$0xff]
        %v374 = vld [vmem:[%s193 + $0x458] sm:$0xff]
        %v375 = vld [vmem:[%s193 + $0x460] sm:$0xff]
        %v376 = vld [vmem:[%s193 + $0x468] sm:$0xff]
        %v377 = vld [vmem:[%s193 + $0x470] sm:$0xff]
        %v378 = vld [vmem:[%s193 + $0x478] sm:$0xff]
        %v379 = vld [vmem:[%s193 + $0x480] sm:$0xff]
        %v380 = vld [vmem:[%s193 + $0x488] sm:$0xff]
        %v381 = vld [vmem:[%s193 + $0x490] sm:$0xff]
        %v382 = vld [vmem:[%s193 + $0x498] sm:$0xff]
        %v383 = vld [vmem:[%s193 + $0x4a0] sm:$0xff]
        %v384 = vld [vmem:[%s193 + $0x4a8] sm:$0xff]
        %v385 = vld [vmem:[%s193 + $0x4b0] sm:$0xff]
        %v386 = vld [vmem:[%s193 + $0x4b8] sm:$0xff]
        %v387 = vld [vmem:[#allocation5] sm:$0xff]
        %v388 = vld [vmem:[#allocation5 + $0x8] sm:$0xff]
        %v389 = vld [vmem:[#allocation5 + $0x10] sm:$0xff]
        %v390 = vld [vmem:[#allocation5 + $0x18] sm:$0xff]
        %v391 = vld [vmem:[#allocation5 + $0x20] sm:$0xff]
        %v392 = vld [vmem:[#allocation5 + $0x28] sm:$0xff]
        %v393 = vld [vmem:[#allocation5 + $0x30] sm:$0xff]
        %v394 = vld [vmem:[#allocation5 + $0x38] sm:$0xff]
        %v395 = vld [vmem:[#allocation5 + $0x40] sm:$0xff]
        %v396 = vld [vmem:[#allocation5 + $0x48] sm:$0xff]
        %v397 = vld [vmem:[#allocation5 + $0x50] sm:$0xff]
        %v398 = vld [vmem:[#allocation5 + $0x58] sm:$0xff]
        %v399 = vld [vmem:[#allocation5 + $0x60] sm:$0xff]
        %v400 = vld [vmem:[#allocation5 + $0x68] sm:$0xff]
        %v401 = vld [vmem:[#allocation5 + $0x70] sm:$0xff]
        %v402 = vld [vmem:[#allocation5 + $0x78] sm:$0xff]
        %v403 = vld [vmem:[#allocation5 + $0x80] sm:$0xff]
        %v404 = vld [vmem:[#allocation5 + $0x88] sm:$0xff]
        %v405 = vld [vmem:[#allocation5 + $0x90] sm:$0xff]
        %v406 = vld [vmem:[#allocation5 + $0x98] sm:$0xff]
        %v407 = vld [vmem:[#allocation5 + $0xa0] sm:$0xff]
        %v408 = vld [vmem:[#allocation5 + $0xa8] sm:$0xff]
        %v409 = vld [vmem:[#allocation5 + $0xb0] sm:$0xff]
        %v410 = vld [vmem:[#allocation5 + $0xb8] sm:$0xff]
        %v411 = vld [vmem:[#allocation5 + $0xc0] sm:$0xff]
        %v412 = vld [vmem:[#allocation5 + $0xc8] sm:$0xff]
        %v413 = vld [vmem:[#allocation5 + $0xd0] sm:$0xff]
        %v414 = vld [vmem:[#allocation5 + $0xd8] sm:$0xff]
        %v415 = vld [vmem:[#allocation5 + $0xe0] sm:$0xff]
        %v416 = vld [vmem:[#allocation5 + $0xe8] sm:$0xff]
        %v417 = vld [vmem:[#allocation5 + $0xf0] sm:$0xff]
        %v418 = vld [vmem:[#allocation5 + $0xf8] sm:$0xff]
        %v419 = vld [vmem:[#allocation5 + $0x100] sm:$0xff]
        %v420 = vld [vmem:[#allocation5 + $0x108] sm:$0xff]
        %v421 = vld [vmem:[#allocation5 + $0x110] sm:$0xff]
        %v422 = vld [vmem:[#allocation5 + $0x118] sm:$0xff]
        %v423 = vld [vmem:[#allocation5 + $0x120] sm:$0xff]
        %v424 = vld [vmem:[#allocation5 + $0x128] sm:$0xff]
        %v425 = vld [vmem:[#allocation5 + $0x130] sm:$0xff]
        %v426 = vld [vmem:[#allocation5 + $0x138] sm:$0xff]
        %v427 = vld [vmem:[#allocation5 + $0x140] sm:$0xff]
        %v428 = vld [vmem:[#allocation5 + $0x148] sm:$0xff]
        %v429 = vld [vmem:[#allocation5 + $0x150] sm:$0xff]
        %v430 = vld [vmem:[#allocation5 + $0x158] sm:$0xff]
        %v431 = vld [vmem:[#allocation5 + $0x160] sm:$0xff]
        %v432 = vld [vmem:[#allocation5 + $0x168] sm:$0xff]
        %v433 = vld [vmem:[#allocation5 + $0x170] sm:$0xff]
        %v434 = vld [vmem:[#allocation5 + $0x178] sm:$0xff]
        %v435 = vld [vmem:[#allocation5 + $0x180] sm:$0xff]
        %v436 = vld [vmem:[#allocation5 + $0x188] sm:$0xff]
        %v437 = vld [vmem:[#allocation5 + $0x190] sm:$0xff]
        %v438 = vld [vmem:[#allocation5 + $0x198] sm:$0xff]
        %v439 = vld [vmem:[#allocation5 + $0x1a0] sm:$0xff]
        %v440 = vld [vmem:[#allocation5 + $0x1a8] sm:$0xff]
        %v441 = vld [vmem:[#allocation5 + $0x1b0] sm:$0xff]
        %v442 = vld [vmem:[#allocation5 + $0x1b8] sm:$0xff]
        %v443 = vld [vmem:[#allocation5 + $0x1c0] sm:$0xff]
        %v444 = vld [vmem:[#allocation5 + $0x1c8] sm:$0xff]
        %v445 = vld [vmem:[#allocation5 + $0x1d0] sm:$0xff]
        %v446 = vld [vmem:[#allocation5 + $0x1d8] sm:$0xff]
        %v447 = vld [vmem:[#allocation5 + $0x1e0] sm:$0xff]
        %v448 = vld [vmem:[#allocation5 + $0x1e8] sm:$0xff]
        %v449 = vld [vmem:[#allocation5 + $0x1f0] sm:$0xff]
        %v450 = vld [vmem:[#allocation5 + $0x1f8] sm:$0xff]
        %v451 = vld [vmem:[#allocation7] sm:$0x1]
        %v453 = vlaneseq
        %v454 = vshrl.u32 %v453, 7
        %v455 = vsub.s32 0, %v454
        %v456 = vrot.slane %v451, %v455
        %458 = vmatprep.subr.mxu0 0.0
        %459 = vmatpush1.msra.mxu0 %v387
        %460 = vmatprep.subr.mxu0 0.0
        %461 = vmatpush1.msra.mxu0 %v388
        %462 = vmatprep.subr.mxu0 0.0
        %463 = vmatpush1.msra.mxu0 %v389
        %464 = vmatprep.subr.mxu0 0.0
        %465 = vmatpush1.msra.mxu0 %v390
        %466 = vmatprep.subr.mxu0 0.0
        %467 = vmatpush1.msra.mxu0 %v391
        %468 = vmatprep.subr.mxu0 0.0
        %469 = vmatpush1.msra.mxu0 %v392
        %470 = vmatprep.subr.mxu0 0.0
        %471 = vmatpush1.msra.mxu0 %v393
        %472 = vmatprep.subr.mxu0 0.0
        %473 = vmatpush1.msra.mxu0 %v394
        %474 = vmatprep.subr.mxu0 0.0
        %475 = vmatpush1.msra.mxu0 %v395
        %476 = vmatprep.subr.mxu0 0.0
        %477 = vmatpush1.msra.mxu0 %v396
        %478 = vmatprep.subr.mxu0 0.0
        %479 = vmatpush1.msra.mxu0 %v397
        %480 = vmatprep.subr.mxu0 0.0
        %481 = vmatpush1.msra.mxu0 %v398
        %482 = vmatprep.subr.mxu0 0.0
        %483 = vmatpush1.msra.mxu0 %v399
        %484 = vmatprep.subr.mxu0 0.0
        %485 = vmatpush1.msra.mxu0 %v400
        %486 = vmatprep.subr.mxu0 0.0
        %487 = vmatpush1.msra.mxu0 %v401
        %488 = vmatprep.subr.mxu0 0.0
        %489 = vmatpush1.msra.mxu0 %v402
        %490 = vmatprep.subr.mxu0 0.0
        %491 = vmatpush1.msra.mxu0 %v403
        %492 = vmatprep.subr.mxu0 0.0
        %493 = vmatpush1.msra.mxu0 %v404
        %494 = vmatprep.subr.mxu0 0.0
        %495 = vmatpush1.msra.mxu0 %v405
        %496 = vmatprep.subr.mxu0 0.0
        %497 = vmatpush1.msra.mxu0 %v406
        %498 = vmatprep.subr.mxu0 0.0
        %499 = vmatpush1.msra.mxu0 %v407
        %500 = vmatprep.subr.mxu0 0.0
        %501 = vmatpush1.msra.mxu0 %v408
        %502 = vmatprep.subr.mxu0 0.0
        %503 = vmatpush1.msra.mxu0 %v409
        %504 = vmatprep.subr.mxu0 0.0
        %505 = vmatpush1.msra.mxu0 %v410
        %506 = vmatprep.subr.mxu0 0.0
        %507 = vmatpush1.msra.mxu0 %v411
        %508 = vmatprep.subr.mxu0 0.0
        %509 = vmatpush1.msra.mxu0 %v412
        %510 = vmatprep.subr.mxu0 0.0
        %511 = vmatpush1.msra.mxu0 %v413
        %512 = vmatprep.subr.mxu0 0.0
        %513 = vmatpush1.msra.mxu0 %v414
        %514 = vmatprep.subr.mxu0 0.0
        %515 = vmatpush1.msra.mxu0 %v415
        %516 = vmatprep.subr.mxu0 0.0
        %517 = vmatpush1.msra.mxu0 %v416
        %518 = vmatprep.subr.mxu0 0.0
        %519 = vmatpush1.msra.mxu0 %v417
        %520 = vmatprep.subr.mxu0 0.0
        %521 = vmatpush1.msra.mxu0 %v418
        %522 = vmatprep.mubr.f32.mxu0 %v236
        %523 = vmatmul.mubr.f32.gmra.mrb[0].mxu0 %v235
        %v524 = vpop.f32.mrb[0].mxu0
        %v525 = vadd.f32 %v456, %v524
        %v526 = vpop.f32.mrb[0].mxu0
        %527 = vmatprep.mubr.f32.mxu0 %v240
        %528 = vmatmul.mubr.f32.gmra.mrb[0].mxu0 %v239
        %v529 = vpop.f32.mrb[0].mxu0
        %v530 = vadd.f32 %v456, %v529
        %v531 = vpop.f32.mrb[0].mxu0
        %532 = vmatprep.mubr.f32.mxu0 %v244
        %533 = vmatmul.mubr.f32.gmra.mrb[0].mxu0 %v243
        %v534 = vpop.f32.mrb[0].mxu0
        %v535 = vadd.f32 %v456, %v534
        %v536 = vpop.f32.mrb[0].mxu0
        %537 = vmatprep.mubr.f32.mxu0 %v248
        %538 = vmatmul.mubr.f32.gmra.mrb[0].mxu0 %v247
        %v539 = vpop.f32.mrb[0].mxu0
        %v540 = vadd.f32 %v456, %v539
        %v541 = vpop.f32.mrb[0].mxu0
        %542 = vmatprep.mubr.f32.mxu0 %v252
        %543 = vmatmul.mubr.f32.gmra.mrb[0].mxu0 %v251
        %v544 = vpop.f32.mrb[0].mxu0
        %v545 = vadd.f32 %v456, %v544
        %v546 = vpop.f32.mrb[0].mxu0
        %547 = vmatprep.mubr.f32.mxu0 %v256
        %548 = vmatmul.mubr.f32.gmra.mrb[0].mxu0 %v255
        %v549 = vpop.f32.mrb[0].mxu0
        %v550 = vadd.f32 %v456, %v549
        %v551 = vpop.f32.mrb[0].mxu0
        %552 = vmatprep.mubr.f32.mxu0 %v260
        %553 = vmatmul.mubr.f32.gmra.mrb[0].mxu0 %v259
        %v554 = vpop.f32.mrb[0].mxu0
        %v555 = vadd.f32 %v456, %v554
        %v556 = vpop.f32.mrb[0].mxu0
        %557 = vmatprep.mubr.f32.mxu0 %v264
        %558 = vmatmul.mubr.f32.gmra.mrb[0].mxu0 %v263
        %v559 = vpop.f32.mrb[0].mxu0
        %v560 = vadd.f32 %v456, %v559
        %v561 = vpop.f32.mrb[0].mxu0
        %562 = vmatprep.mubr.f32.mxu0 %v268
        %563 = vmatmul.mubr.f32.gmra.mrb[0].mxu0 %v267
        %v564 = vpop.f32.mrb[0].mxu0
        %v565 = vadd.f32 %v456, %v564
        %v566 = vpop.f32.mrb[0].mxu0
        %567 = vmatprep.mubr.f32.mxu0 %v272
        %568 = vmatmul.mubr.f32.gmra.mrb[0].mxu0 %v271
        %v569 = vpop.f32.mrb[0].mxu0
        %v570 = vadd.f32 %v456, %v569
        %v571 = vpop.f32.mrb[0].mxu0
        %572 = vmatprep.mubr.f32.mxu0 %v276
        %573 = vmatmul.mubr.f32.gmra.mrb[0].mxu0 %v275
        %v574 = vpop.f32.mrb[0].mxu0
        %v575 = vadd.f32 %v456, %v574
        %v576 = vpop.f32.mrb[0].mxu0
        %577 = vmatprep.mubr.f32.mxu0 %v280
        %578 = vmatmul.mubr.f32.gmra.mrb[0].mxu0 %v279
        %v579 = vpop.f32.mrb[0].mxu0
        %v580 = vadd.f32 %v456, %v579
        %v581 = vpop.f32.mrb[0].mxu0
        %582 = vmatprep.mubr.f32.mxu0 %v284
        %583 = vmatmul.mubr.f32.gmra.mrb[0].mxu0 %v283
        %v584 = vpop.f32.mrb[0].mxu0
        %v585 = vadd.f32 %v456, %v584
        %v586 = vpop.f32.mrb[0].mxu0
        %587 = vmatprep.mubr.f32.mxu0 %v288
        %588 = vmatmul.mubr.f32.gmra.mrb[0].mxu0 %v287
        %v589 = vpop.f32.mrb[0].mxu0
        %v590 = vadd.f32 %v456, %v589
        %v591 = vpop.f32.mrb[0].mxu0
        %592 = vmatprep.mubr.f32.mxu0 %v292
        %593 = vmatmul.mubr.f32.gmra.mrb[0].mxu0 %v291
        %v594 = vpop.f32.mrb[0].mxu0
        %v595 = vadd.f32 %v456, %v594
        %v596 = vpop.f32.mrb[0].mxu0
        %597 = vmatprep.mubr.f32.mxu0 %v296
        %598 = vmatmul.mubr.f32.gmra.mrb[0].mxu0 %v295
        %v599 = vpop.f32.mrb[0].mxu0
        %v600 = vadd.f32 %v456, %v599
        %v601 = vpop.f32.mrb[0].mxu0
        %602 = vmatprep.mubr.f32.mxu0 %v300
        %603 = vmatmul.mubr.f32.gmra.mrb[0].mxu0 %v299
        %v604 = vpop.f32.mrb[0].mxu0
        %v605 = vadd.f32 %v456, %v604
        %v606 = vpop.f32.mrb[0].mxu0
        %607 = vmatprep.mubr.f32.mxu0 %v304
        %608 = vmatmul.mubr.f32.gmra.mrb[0].mxu0 %v303
        %v609 = vpop.f32.mrb[0].mxu0
        %v610 = vadd.f32 %v456, %v609
        %v611 = vpop.f32.mrb[0].mxu0
        %612 = vmatprep.mubr.f32.mxu0 %v308
        %613 = vmatmul.mubr.f32.gmra.mrb[0].mxu0 %v307
        %v614 = vpop.f32.mrb[0].mxu0
        %v615 = vadd.f32 %v456, %v614
        %v616 = vpop.f32.mrb[0].mxu0
        %617 = vmatprep.mubr.f32.mxu0 %v312
        %618 = vmatmul.mubr.f32.gmra.mrb[0].mxu0 %v311
        %v619 = vpop.f32.mrb[0].mxu0
        %v620 = vadd.f32 %v456, %v619
        %v621 = vpop.f32.mrb[0].mxu0
        %622 = vmatprep.mubr.f32.mxu0 %v316
        %623 = vmatmul.mubr.f32.gmra.mrb[0].mxu0 %v315
        %v624 = vpop.f32.mrb[0].mxu0
        %v625 = vadd.f32 %v456, %v624
        %v626 = vpop.f32.mrb[0].mxu0
        %627 = vmatprep.mubr.f32.mxu0 %v320
        %628 = vmatmul.mubr.f32.gmra.mrb[0].mxu0 %v319
        %v629 = vpop.f32.mrb[0].mxu0
        %v630 = vadd.f32 %v456, %v629
        %v631 = vpop.f32.mrb[0].mxu0
        %632 = vmatprep.mubr.f32.mxu0 %v324
        %633 = vmatmul.mubr.f32.gmra.mrb[0].mxu0 %v323
        %v634 = vpop.f32.mrb[0].mxu0
        %v635 = vadd.f32 %v456, %v634
        %v636 = vpop.f32.mrb[0].mxu0
        %637 = vmatprep.mubr.f32.mxu0 %v328
        %638 = vmatmul.mubr.f32.gmra.mrb[0].mxu0 %v327
        %v639 = vpop.f32.mrb[0].mxu0
        %v640 = vadd.f32 %v456, %v639
        %v641 = vpop.f32.mrb[0].mxu0
        %642 = vmatprep.mubr.f32.mxu0 %v332
        %643 = vmatmul.mubr.f32.gmra.mrb[0].mxu0 %v331
        %v644 = vpop.f32.mrb[0].mxu0
        %v645 = vadd.f32 %v456, %v644
        %v646 = vpop.f32.mrb[0].mxu0
        %647 = vmatprep.mubr.f32.mxu0 %v336
        %648 = vmatmul.mubr.f32.gmra.mrb[0].mxu0 %v335
        %v649 = vpop.f32.mrb[0].mxu0
        %v650 = vadd.f32 %v456, %v649
        %v651 = vpop.f32.mrb[0].mxu0
        %652 = vmatprep.mubr.f32.mxu0 %v340
        %653 = vmatmul.mubr.f32.gmra.mrb[0].mxu0 %v339
        %v654 = vpop.f32.mrb[0].mxu0
        %v655 = vadd.f32 %v456, %v654
        %v656 = vpop.f32.mrb[0].mxu0
        %657 = vmatprep.mubr.f32.mxu0 %v344
        %658 = vmatmul.mubr.f32.gmra.mrb[0].mxu0 %v343
        %v659 = vpop.f32.mrb[0].mxu0
        %v660 = vadd.f32 %v456, %v659
        %v661 = vpop.f32.mrb[0].mxu0
        %662 = vmatprep.mubr.f32.mxu0 %v348
        %663 = vmatmul.mubr.f32.gmra.mrb[0].mxu0 %v347
        %v664 = vpop.f32.mrb[0].mxu0
        %v665 = vadd.f32 %v456, %v664
        %v666 = vpop.f32.mrb[0].mxu0
        %667 = vmatprep.mubr.f32.mxu0 %v352
        %668 = vmatmul.mubr.f32.gmra.mrb[0].mxu0 %v351
        %v669 = vpop.f32.mrb[0].mxu0
        %v670 = vadd.f32 %v456, %v669
        %v671 = vpop.f32.mrb[0].mxu0
        %672 = vmatprep.mubr.f32.mxu0 %v356
        %673 = vmatmul.mubr.f32.gmra.mrb[0].mxu0 %v355
        %v674 = vpop.f32.mrb[0].mxu0
        %v675 = vadd.f32 %v456, %v674
        %v676 = vpop.f32.mrb[0].mxu0
        %677 = vmatprep.mubr.f32.mxu0 %v360
        %678 = vmatmul.mubr.f32.gmra.mrb[0].mxu0 %v359
        %v679 = vpop.f32.mrb[0].mxu0
        %v680 = vadd.f32 %v456, %v679
        %v681 = vpop.f32.mrb[0].mxu0
        %682 = vmatprep.mubr.f32.mxu0 %v364
        %683 = vmatmul.mubr.f32.gmra.mrb[0].mxu0 %v363
        %v684 = vpop.f32.mrb[0].mxu0
        %v685 = vadd.f32 %v456, %v684
        %v686 = vpop.f32.mrb[0].mxu0
        %687 = vmatprep.mubr.f32.mxu0 %v368
        %688 = vmatmul.mubr.f32.gmra.mrb[0].mxu0 %v367
        %v689 = vpop.f32.mrb[0].mxu0
        %v690 = vadd.f32 %v456, %v689
        %v691 = vpop.f32.mrb[0].mxu0
        %692 = vmatprep.mubr.f32.mxu0 %v372
        %693 = vmatmul.mubr.f32.gmra.mrb[0].mxu0 %v371
        %v694 = vpop.f32.mrb[0].mxu0
        %v695 = vadd.f32 %v456, %v694
        %v696 = vpop.f32.mrb[0].mxu0
        %697 = vmatprep.mubr.f32.mxu0 %v376
        %698 = vmatmul.mubr.f32.gmra.mrb[0].mxu0 %v375
        %v699 = vpop.f32.mrb[0].mxu0
        %v700 = vadd.f32 %v456, %v699
        %v701 = vpop.f32.mrb[0].mxu0
        %702 = vmatprep.mubr.f32.mxu0 %v380
        %703 = vmatmul.mubr.f32.gmra.mrb[0].mxu0 %v379
        %v704 = vpop.f32.mrb[0].mxu0
        %v705 = vadd.f32 %v456, %v704
        %v706 = vpop.f32.mrb[0].mxu0
        %707 = vmatprep.mubr.f32.mxu0 %v384
        %708 = vmatmul.mubr.f32.gmra.mrb[0].mxu0 %v383
        %v709 = vpop.f32.mrb[0].mxu0
        %v710 = vadd.f32 %v456, %v709
        %v711 = vpop.f32.mrb[0].mxu0
        %712 = vdwg.mxu0
        %713 = vmatprep.subr.mxu0 0.0
        %714 = vmatpush1.msra.mxu0 %v419
        %715 = vmatprep.subr.mxu0 0.0
        %716 = vmatpush1.msra.mxu0 %v420
        %717 = vmatprep.subr.mxu0 0.0
        %718 = vmatpush1.msra.mxu0 %v421
        %719 = vmatprep.subr.mxu0 0.0
        %720 = vmatpush1.msra.mxu0 %v422
        %721 = vmatprep.subr.mxu0 0.0
        %722 = vmatpush1.msra.mxu0 %v423
        %723 = vmatprep.subr.mxu0 0.0
        %724 = vmatpush1.msra.mxu0 %v424
        %725 = vmatprep.subr.mxu0 0.0
        %726 = vmatpush1.msra.mxu0 %v425
        %727 = vmatprep.subr.mxu0 0.0
        %728 = vmatpush1.msra.mxu0 %v426
        %729 = vmatprep.subr.mxu0 0.0
        %730 = vmatpush1.msra.mxu0 %v427
        %731 = vmatprep.subr.mxu0 0.0
        %732 = vmatpush1.msra.mxu0 %v428
        %733 = vmatprep.subr.mxu0 0.0
        %734 = vmatpush1.msra.mxu0 %v429
        %735 = vmatprep.subr.mxu0 0.0
        %736 = vmatpush1.msra.mxu0 %v430
        %737 = vmatprep.subr.mxu0 0.0
        %738 = vmatpush1.msra.mxu0 %v431
        %739 = vmatprep.subr.mxu0 0.0
        %740 = vmatpush1.msra.mxu0 %v432
        %741 = vmatprep.subr.mxu0 0.0
        %742 = vmatpush1.msra.mxu0 %v433
        %743 = vmatprep.subr.mxu0 0.0
        %744 = vmatpush1.msra.mxu0 %v434
        %745 = vmatprep.subr.mxu0 0.0
        %746 = vmatpush1.msra.mxu0 %v435
        %747 = vmatprep.subr.mxu0 0.0
        %748 = vmatpush1.msra.mxu0 %v436
        %749 = vmatprep.subr.mxu0 0.0
        %750 = vmatpush1.msra.mxu0 %v437
        %751 = vmatprep.subr.mxu0 0.0
        %752 = vmatpush1.msra.mxu0 %v438
        %753 = vmatprep.subr.mxu0 0.0
        %754 = vmatpush1.msra.mxu0 %v439
        %755 = vmatprep.subr.mxu0 0.0
        %756 = vmatpush1.msra.mxu0 %v440
        %757 = vmatprep.subr.mxu0 0.0
        %758 = vmatpush1.msra.mxu0 %v441
        %759 = vmatprep.subr.mxu0 0.0
        %760 = vmatpush1.msra.mxu0 %v442
        %761 = vmatprep.subr.mxu0 0.0
        %762 = vmatpush1.msra.mxu0 %v443
        %763 = vmatprep.subr.mxu0 0.0
        %764 = vmatpush1.msra.mxu0 %v444
        %765 = vmatprep.subr.mxu0 0.0
        %766 = vmatpush1.msra.mxu0 %v445
        %767 = vmatprep.subr.mxu0 0.0
        %768 = vmatpush1.msra.mxu0 %v446
        %769 = vmatprep.subr.mxu0 0.0
        %770 = vmatpush1.msra.mxu0 %v447
        %771 = vmatprep.subr.mxu0 0.0
        %772 = vmatpush1.msra.mxu0 %v448
        %773 = vmatprep.subr.mxu0 0.0
        %774 = vmatpush1.msra.mxu0 %v449
        %775 = vmatprep.subr.mxu0 0.0
        %776 = vmatpush1.msra.mxu0 %v450
        %777 = vmatprep.mubr.f32.mxu0 %v238
        %778 = vmatmul.mubr.f32.gmra.mrb[0].mxu0 %v237
        %v779 = vpop.f32.mrb[0].mxu0
        %v780 = vadd.f32 %v525, %v779
        %v781 = vpop.f32.mrb[0].mxu0
        %782 = vmatprep.mubr.f32.mxu0 %v242
        %783 = vmatmul.mubr.f32.gmra.mrb[0].mxu0 %v241
        %v784 = vpop.f32.mrb[0].mxu0
        %v785 = vadd.f32 %v530, %v784
        %v786 = vpop.f32.mrb[0].mxu0
        %787 = vmatprep.mubr.f32.mxu0 %v246
        %788 = vmatmul.mubr.f32.gmra.mrb[0].mxu0 %v245
        %v789 = vpop.f32.mrb[0].mxu0
        %v790 = vadd.f32 %v535, %v789
        %v791 = vpop.f32.mrb[0].mxu0
        %792 = vmatprep.mubr.f32.mxu0 %v250
        %793 = vmatmul.mubr.f32.gmra.mrb[0].mxu0 %v249
        %v794 = vpop.f32.mrb[0].mxu0
        %v795 = vadd.f32 %v540, %v794
        %v796 = vpop.f32.mrb[0].mxu0
        %797 = vmatprep.mubr.f32.mxu0 %v254
        %798 = vmatmul.mubr.f32.gmra.mrb[0].mxu0 %v253
        %v799 = vpop.f32.mrb[0].mxu0
        %v800 = vadd.f32 %v545, %v799
        %v801 = vpop.f32.mrb[0].mxu0
        %802 = vmatprep.mubr.f32.mxu0 %v258
        %803 = vmatmul.mubr.f32.gmra.mrb[0].mxu0 %v257
        %v804 = vpop.f32.mrb[0].mxu0
        %v805 = vadd.f32 %v550, %v804
        %v806 = vpop.f32.mrb[0].mxu0
        %807 = vmatprep.mubr.f32.mxu0 %v262
        %808 = vmatmul.mubr.f32.gmra.mrb[0].mxu0 %v261
        %v809 = vpop.f32.mrb[0].mxu0
        %v810 = vadd.f32 %v555, %v809
        %v811 = vpop.f32.mrb[0].mxu0
        %812 = vmatprep.mubr.f32.mxu0 %v266
        %813 = vmatmul.mubr.f32.gmra.mrb[0].mxu0 %v265
        %v814 = vpop.f32.mrb[0].mxu0
        %v815 = vadd.f32 %v560, %v814
        %v816 = vpop.f32.mrb[0].mxu0
        %817 = vmatprep.mubr.f32.mxu0 %v270
        %818 = vmatmul.mubr.f32.gmra.mrb[0].mxu0 %v269
        %v819 = vpop.f32.mrb[0].mxu0
        %v820 = vadd.f32 %v565, %v819
        %v821 = vpop.f32.mrb[0].mxu0
        %822 = vmatprep.mubr.f32.mxu0 %v274
        %823 = vmatmul.mubr.f32.gmra.mrb[0].mxu0 %v273
        %v824 = vpop.f32.mrb[0].mxu0
        %v825 = vadd.f32 %v570, %v824
        %v826 = vpop.f32.mrb[0].mxu0
        %827 = vmatprep.mubr.f32.mxu0 %v278
        %828 = vmatmul.mubr.f32.gmra.mrb[0].mxu0 %v277
        %v829 = vpop.f32.mrb[0].mxu0
        %v830 = vadd.f32 %v575, %v829
        %v831 = vpop.f32.mrb[0].mxu0
        %832 = vmatprep.mubr.f32.mxu0 %v282
        %833 = vmatmul.mubr.f32.gmra.mrb[0].mxu0 %v281
        %v834 = vpop.f32.mrb[0].mxu0
        %v835 = vadd.f32 %v580, %v834
        %v836 = vpop.f32.mrb[0].mxu0
        %837 = vmatprep.mubr.f32.mxu0 %v286
        %838 = vmatmul.mubr.f32.gmra.mrb[0].mxu0 %v285
        %v839 = vpop.f32.mrb[0].mxu0
        %v840 = vadd.f32 %v585, %v839
        %v841 = vpop.f32.mrb[0].mxu0
        %842 = vmatprep.mubr.f32.mxu0 %v290
        %843 = vmatmul.mubr.f32.gmra.mrb[0].mxu0 %v289
        %v844 = vpop.f32.mrb[0].mxu0
        %v845 = vadd.f32 %v590, %v844
        %v846 = vpop.f32.mrb[0].mxu0
        %847 = vmatprep.mubr.f32.mxu0 %v294
        %848 = vmatmul.mubr.f32.gmra.mrb[0].mxu0 %v293
        %v849 = vpop.f32.mrb[0].mxu0
        %v850 = vadd.f32 %v595, %v849
        %v851 = vpop.f32.mrb[0].mxu0
        %852 = vmatprep.mubr.f32.mxu0 %v298
        %853 = vmatmul.mubr.f32.gmra.mrb[0].mxu0 %v297
        %v854 = vpop.f32.mrb[0].mxu0
        %v855 = vadd.f32 %v600, %v854
        %v856 = vpop.f32.mrb[0].mxu0
        %857 = vmatprep.mubr.f32.mxu0 %v302
        %858 = vmatmul.mubr.f32.gmra.mrb[0].mxu0 %v301
        %v859 = vpop.f32.mrb[0].mxu0
        %v860 = vadd.f32 %v605, %v859
        %v861 = vpop.f32.mrb[0].mxu0
        %862 = vmatprep.mubr.f32.mxu0 %v306
        %863 = vmatmul.mubr.f32.gmra.mrb[0].mxu0 %v305
        %v864 = vpop.f32.mrb[0].mxu0
        %v865 = vadd.f32 %v610, %v864
        %v866 = vpop.f32.mrb[0].mxu0
        %867 = vmatprep.mubr.f32.mxu0 %v310
        %868 = vmatmul.mubr.f32.gmra.mrb[0].mxu0 %v309
        %v869 = vpop.f32.mrb[0].mxu0
        %v870 = vadd.f32 %v615, %v869
        %v871 = vpop.f32.mrb[0].mxu0
        %872 = vmatprep.mubr.f32.mxu0 %v314
        %873 = vmatmul.mubr.f32.gmra.mrb[0].mxu0 %v313
        %v874 = vpop.f32.mrb[0].mxu0
        %v875 = vadd.f32 %v620, %v874
        %v876 = vpop.f32.mrb[0].mxu0
        %877 = vmatprep.mubr.f32.mxu0 %v318
        %878 = vmatmul.mubr.f32.gmra.mrb[0].mxu0 %v317
        %v879 = vpop.f32.mrb[0].mxu0
        %v880 = vadd.f32 %v625, %v879
        %v881 = vpop.f32.mrb[0].mxu0
        %882 = vmatprep.mubr.f32.mxu0 %v322
        %883 = vmatmul.mubr.f32.gmra.mrb[0].mxu0 %v321
        %v884 = vpop.f32.mrb[0].mxu0
        %v885 = vadd.f32 %v630, %v884
        %v886 = vpop.f32.mrb[0].mxu0
        %887 = vmatprep.mubr.f32.mxu0 %v326
        %888 = vmatmul.mubr.f32.gmra.mrb[0].mxu0 %v325
        %v889 = vpop.f32.mrb[0].mxu0
        %v890 = vadd.f32 %v635, %v889
        %v891 = vpop.f32.mrb[0].mxu0
        %892 = vmatprep.mubr.f32.mxu0 %v330
        %893 = vmatmul.mubr.f32.gmra.mrb[0].mxu0 %v329
        %v894 = vpop.f32.mrb[0].mxu0
        %v895 = vadd.f32 %v640, %v894
        %v896 = vpop.f32.mrb[0].mxu0
        %897 = vmatprep.mubr.f32.mxu0 %v334
        %898 = vmatmul.mubr.f32.gmra.mrb[0].mxu0 %v333
        %v899 = vpop.f32.mrb[0].mxu0
        %v900 = vadd.f32 %v645, %v899
        %v901 = vpop.f32.mrb[0].mxu0
        %902 = vmatprep.mubr.f32.mxu0 %v338
        %903 = vmatmul.mubr.f32.gmra.mrb[0].mxu0 %v337
        %v904 = vpop.f32.mrb[0].mxu0
        %v905 = vadd.f32 %v650, %v904
        %v906 = vpop.f32.mrb[0].mxu0
        %907 = vmatprep.mubr.f32.mxu0 %v342
        %908 = vmatmul.mubr.f32.gmra.mrb[0].mxu0 %v341
        %v909 = vpop.f32.mrb[0].mxu0
        %v910 = vadd.f32 %v655, %v909
        %v911 = vpop.f32.mrb[0].mxu0
        %912 = vmatprep.mubr.f32.mxu0 %v346
        %913 = vmatmul.mubr.f32.gmra.mrb[0].mxu0 %v345
        %v914 = vpop.f32.mrb[0].mxu0
        %v915 = vadd.f32 %v660, %v914
        %v916 = vpop.f32.mrb[0].mxu0
        %917 = vmatprep.mubr.f32.mxu0 %v350
        %918 = vmatmul.mubr.f32.gmra.mrb[0].mxu0 %v349
        %v919 = vpop.f32.mrb[0].mxu0
        %v920 = vadd.f32 %v665, %v919
        %v921 = vpop.f32.mrb[0].mxu0
        %922 = vmatprep.mubr.f32.mxu0 %v354
        %923 = vmatmul.mubr.f32.gmra.mrb[0].mxu0 %v353
        %v924 = vpop.f32.mrb[0].mxu0
        %v925 = vadd.f32 %v670, %v924
        %v926 = vpop.f32.mrb[0].mxu0
        %927 = vmatprep.mubr.f32.mxu0 %v358
        %928 = vmatmul.mubr.f32.gmra.mrb[0].mxu0 %v357
        %v929 = vpop.f32.mrb[0].mxu0
        %v930 = vadd.f32 %v675, %v929
        %v931 = vpop.f32.mrb[0].mxu0
        %932 = vmatprep.mubr.f32.mxu0 %v362
        %933 = vmatmul.mubr.f32.gmra.mrb[0].mxu0 %v361
        %v934 = vpop.f32.mrb[0].mxu0
        %v935 = vadd.f32 %v680, %v934
        %v936 = vpop.f32.mrb[0].mxu0
        %937 = vmatprep.mubr.f32.mxu0 %v366
        %938 = vmatmul.mubr.f32.gmra.mrb[0].mxu0 %v365
        %v939 = vpop.f32.mrb[0].mxu0
        %v940 = vadd.f32 %v685, %v939
        %v941 = vpop.f32.mrb[0].mxu0
        %942 = vmatprep.mubr.f32.mxu0 %v370
        %943 = vmatmul.mubr.f32.gmra.mrb[0].mxu0 %v369
        %v944 = vpop.f32.mrb[0].mxu0
        %v945 = vadd.f32 %v690, %v944
        %v946 = vpop.f32.mrb[0].mxu0
        %947 = vmatprep.mubr.f32.mxu0 %v374
        %948 = vmatmul.mubr.f32.gmra.mrb[0].mxu0 %v373
        %v949 = vpop.f32.mrb[0].mxu0
        %v950 = vadd.f32 %v695, %v949
        %v951 = vpop.f32.mrb[0].mxu0
        %952 = vmatprep.mubr.f32.mxu0 %v378
        %953 = vmatmul.mubr.f32.gmra.mrb[0].mxu0 %v377
        %v954 = vpop.f32.mrb[0].mxu0
        %v955 = vadd.f32 %v700, %v954
        %v956 = vpop.f32.mrb[0].mxu0
        %957 = vmatprep.mubr.f32.mxu0 %v382
        %958 = vmatmul.mubr.f32.gmra.mrb[0].mxu0 %v381
        %v959 = vpop.f32.mrb[0].mxu0
        %v960 = vadd.f32 %v705, %v959
        %v961 = vpop.f32.mrb[0].mxu0
        %962 = vmatprep.mubr.f32.mxu0 %v386
        %963 = vmatmul.mubr.f32.gmra.mrb[0].mxu0 %v385
        %v964 = vpop.f32.mrb[0].mxu0
        %v965 = vadd.f32 %v710, %v964
        %v966 = vpop.f32.mrb[0].mxu0
        %967 = vdwg.mxu0
        %968 = vst [vmem:[%s223] sm:$0xff] %v780
        %969 = vst [vmem:[%s223 + $0x8] sm:$0xff] %v785
        %970 = vst [vmem:[%s223 + $0x10] sm:$0xff] %v790
        %971 = vst [vmem:[%s223 + $0x18] sm:$0xff] %v795
        %972 = vst [vmem:[%s223 + $0x20] sm:$0xff] %v800
        %973 = vst [vmem:[%s223 + $0x28] sm:$0xff] %v805
        %974 = vst [vmem:[%s223 + $0x30] sm:$0xff] %v810
        %975 = vst [vmem:[%s223 + $0x38] sm:$0xff] %v815
        %976 = vst [vmem:[%s223 + $0x40] sm:$0xff] %v820
        %977 = vst [vmem:[%s223 + $0x48] sm:$0xff] %v825
        %978 = vst [vmem:[%s223 + $0x50] sm:$0xff] %v830
        %979 = vst [vmem:[%s223 + $0x58] sm:$0xff] %v835
        %980 = vst [vmem:[%s223 + $0x60] sm:$0xff] %v840
        %981 = vst [vmem:[%s223 + $0x68] sm:$0xff] %v845
        %982 = vst [vmem:[%s223 + $0x70] sm:$0xff] %v850
        %983 = vst [vmem:[%s223 + $0x78] sm:$0xff] %v855
        %984 = vst [vmem:[%s223 + $0x80] sm:$0xff] %v860
        %985 = vst [vmem:[%s223 + $0x88] sm:$0xff] %v865
        %986 = vst [vmem:[%s223 + $0x90] sm:$0xff] %v870
        %987 = vst [vmem:[%s223 + $0x98] sm:$0xff] %v875
        %988 = vst [vmem:[%s223 + $0xa0] sm:$0xff] %v880
        %989 = vst [vmem:[%s223 + $0xa8] sm:$0xff] %v885
        %990 = vst [vmem:[%s223 + $0xb0] sm:$0xff] %v890
        %991 = vst [vmem:[%s223 + $0xb8] sm:$0xff] %v895
        %992 = vst [vmem:[%s223 + $0xc0] sm:$0xff] %v900
        %993 = vst [vmem:[%s223 + $0xc8] sm:$0xff] %v905
        %994 = vst [vmem:[%s223 + $0xd0] sm:$0xff] %v910
        %995 = vst [vmem:[%s223 + $0xd8] sm:$0xff] %v915
        %996 = vst [vmem:[%s223 + $0xe0] sm:$0xff] %v920
        %997 = vst [vmem:[%s223 + $0xe8] sm:$0xff] %v925
        %998 = vst [vmem:[%s223 + $0xf0] sm:$0xff] %v930
        %999 = vst [vmem:[%s223 + $0xf8] sm:$0xff] %v935
        %1000 = vst [vmem:[%s223 + $0x100] sm:$0xff] %v940
        %1001 = vst [vmem:[%s223 + $0x108] sm:$0xff] %v945
        %1002 = vst [vmem:[%s223 + $0x110] sm:$0xff] %v950
        %1003 = vst [vmem:[%s223 + $0x118] sm:$0xff] %v955
        %1004 = vst [vmem:[%s223 + $0x120] sm:$0xff] %v960
        %1005 = vst [vmem:[%s223 + $0x128] sm:$0xff] %v965
        %s1006 = sand.u32 %s97, 1
        %s1007 = scalar_lea.sflag [#allocation4], %s1006
        %s1008 = sand.u32 %s97, 1
        %s1009 = smul.addr %s1008, 304
        %s1010 = scalar_lea.vmem [#allocation8], %s1009
        // Predicated region
        $region45: #{tpu_custom_call.1} parent=31 // pred_check
          %p1011 = pneg %p107
        $region46: #{tpu_custom_call.1} parent=31 // pred_check_branch
          %1013 = sbr.rel (%p1011) target = $region48
        $region47: #{tpu_custom_call.1} parent=31 // pred_region
          %s1014 = smul.u32 38, %s21
          %s1015 = ssub.s32 75, %s1014
          %p1016 = scmp.lt.s32.totalorder %s1015, 38
          %s1017 = scalar_select %p1016, %s1015, 38
          %s1018 = smul.u32 128, %s1017
          %s1020 = ssub.s32 4864, %s1018
          %1021 = vsyncadd %s1007, %s1020
          %p1022 = scmp.ne.s32.totalorder 0, %s1018
          %s1023 = smul.addr %s1014, 128
          %s1024 = scalar_lea.hbm %s3, %s1023
          %s1025 = smul.u32 8, %s1017
          %s1026 = sshll.u32 %s1010, 4
          %s1027 = int_to_ptr.vmem [resolvable:$true] %s1026
          %s1028 = sshll.u32 %s1025, 4
          %1032 = dma.vmem_to_hbm [thread:$0]  (%p1022), %s1027, %s1028, %s1024, %s1007, 128, 128, 8
        $region48: #{tpu_custom_call.1} parent=31 // pred_fallthru
          _
      $region32: #{tpu_custom_call.1} parent=5 // pred_fallthru
        _
      %p1033 = scmp.le.s32.totalorder 2, %s16
      // Predicated region
      $region49: #{tpu_custom_call.1} parent=5 // pred_check
        %p1034 = pneg %p1033
      $region50: #{tpu_custom_call.1} parent=5 // pred_check_branch
        %1036 = sbr.rel (%p1034) target = $region52
      $region51: #{tpu_custom_call.1} parent=5 // pred_region
        %s1037 = ssub.s32 %s16, 2
        // Predicated region
        $region53: #{tpu_custom_call.1} parent=51 // pred_check
          %p1038 = pneg %p113
        $region54: #{tpu_custom_call.1} parent=51 // pred_check_branch
          %1040 = sbr.rel (%p1038) target = $region56
        $region55: #{tpu_custom_call.1} parent=51 // pred_region
          %s1041 = sand.u32 %s98, 1
          %s1042 = scalar_lea.sflag [#allocation4], %s1041
          %s1043 = sand.u32 %s98, 1
          %s1044 = smul.addr %s1043, 304
          %s1045 = scalar_lea.vmem [#allocation8], %s1044
          %1046 = dma.done %s1042, 4864
        $region56: #{tpu_custom_call.1} parent=51 // pred_fallthru
          _
      $region52: #{tpu_custom_call.1} parent=5 // pred_fallthru
        _
    $region6: #{tpu_custom_call.1} parent=1 // loop_footer
      %s20 = sadd.s32 1, %s16
    $region7: #{tpu_custom_call.1} parent=1 // loop_footer_branch
      %15 = sbr.rel target = $region3
    $region8: #{tpu_custom_call.1} parent=1 // loop_exit
      _
    %1047 = vsyncpa [#allocation3], 1
    %s1048 = scalar_lea.sflag [#allocation3], 1
    %1049 = vsyncpa %s1048, 1
    %1050 = vsyncpa [#allocation6], 1
    %1051 = vsyncpa [#allocation4], 1
    %s1052 = scalar_lea.sflag [#allocation4], 1
    %1053 = vsyncpa %s1052, 1

</llo_original>
